<compile_context>
chip_gen: v5e
topology: v5e:2x2
jax: 0.10.0
libtpu: 0.0.40
codegen_flags: <defaults>
</compile_context>

<pallas_src>
import jax
import jax.numpy as jnp
from jax.experimental import pallas as pl
from jax.experimental.pallas import tpu as pltpu


def _round_up(x: int, m: int) -> int:
    return ((x + m - 1) // m) * m


def _largest_divisor_tile(dim: int, unit: int, max_tile: int) -> int:
    """Largest multiple of `unit` that divides `dim` and is <= max_tile."""
    if dim <= unit:
        return dim
    t = min(max_tile, dim)
    t -= t % unit
    while t > unit:
        if dim % t == 0:
            return t
        t -= unit
    return unit


# Double-buffered VMEM footprint of one tile plan (bf16 inputs, f32 output).
def _vmem_footprint(tm: int, tn: int, tk: int) -> int:
    return 2 * (tm * tk * 2 + tk * tn * 2 + tn * 4 + tm * tn * 4)


_VMEM_TILE_BUDGET = 40 * 1024 * 1024  # safe even on v7x (64 MiB physical)


def _choose_tiles(bp8: int, kp: int, np_: int):
    tn = _largest_divisor_tile(np_, 128, 512)
    tk = _largest_divisor_tile(kp, 128, 1024)
    tm = bp8  # cover the whole batch if it fits -> W streamed from HBM once
    while _vmem_footprint(tm, tn, tk) > _VMEM_TILE_BUDGET:
        if tm > 256:
            tm = max(256, _round_up(tm // 2, 8))
        elif tk > 128:
            tk = _largest_divisor_tile(kp, 128, tk - 128)
        elif tn > 128:
            tn = _largest_divisor_tile(np_, 128, tn - 128)
        else:
            break
    return tm, tn, tk


def _linear_relu_kernel(x_ref, w_ref, b_ref, o_ref):
    # x_ref: (tm, tk) bf16, w_ref: (tk, tn) bf16, b_ref: (1, tn) f32,
    # o_ref: (tm, tn) f32 -- resident across the K axis (index_map ignores k),
    # so it doubles as the accumulator: init with bias, accumulate, ReLU last.
    k = pl.program_id(2)

    @pl.when(k == 0)
    def _():
        o_ref[...] = jnp.broadcast_to(b_ref[...], o_ref.shape)

    o_ref[...] += jnp.dot(
        x_ref[...], w_ref[...], preferred_element_type=jnp.float32
    )

    @pl.when(k == pl.num_programs(2) - 1)
    def _():
        o_ref[...] = jnp.maximum(o_ref[...], 0.0)


def quantum_pattern_layer(x, params):
    """relu(x @ W.T + b) with pre-padded, pre-transposed bf16 weights.

    x:      (B, D_in) float32 (cast to bf16 for the MXU inside this wrapper)
    params: dict from init_params() with
            "w_t"  (Kp, Np) bf16   -- padded/transposed weight
            "bias" (1, Np)  f32    -- padded bias
            "d_in", "d_out" ints
    """
    w_t = params["w_t"]
    bias = params["bias"]
    d_in = params["d_in"]
    d_out = params["d_out"]

    B, D_in = x.shape
    assert D_in == d_in, "weight/input dim mismatch"
    Kp, Np = w_t.shape

    bp8 = _round_up(B, 8)
    tm, tn, tk = _choose_tiles(bp8, Kp, Np)

    # v7x has 2 TensorCores: avoid a grid that collapses to (1, 1, K).
    if bp8 // tm == 1 and Np // tn == 1 and Np >= 256:
        tn = _largest_divisor_tile(Np, 128, max(128, tn // 2))

    Bp = _round_up(bp8, tm)

    # Per-call x pad + bf16 cast (padded K columns hit zero weight rows, padded
    # batch rows are sliced off below).  Weight/bias padding already done at init.
    # TODO(synk): callers that can accept 8/128-aligned shapes could skip this
    # pad and the output slice entirely.
    xp = jnp.pad(x, ((0, Bp - B), (0, Kp - D_in))).astype(jnp.bfloat16)

    grid = (Bp // tm, Np // tn, Kp // tk)

    cost = pl.CostEstimate(
        flops=2 * Bp * Kp * Np,
        transcendentals=0,
        bytes_accessed=(
            grid[1] * Bp * Kp * 2      # x re-read once per N block (bf16)
            + grid[0] * Kp * Np * 2    # W re-read once per M block (bf16)
            + Np * 4                   # bias
            + Bp * Np * 4              # output (f32)
        ),
    )

    vmem_limit = int(
        min(48 << 20, max(16 << 20, _vmem_footprint(tm, tn, tk) + (4 << 20)))
    )

    out_padded = pl.pallas_call(
        _linear_relu_kernel,
        out_shape=jax.ShapeDtypeStruct((Bp, Np), jnp.float32),
        grid_spec=pltpu.PrefetchScalarGridSpec(
            num_scalar_prefetch=0,
            grid=grid,
            in_specs=[
                pl.BlockSpec((tm, tk), lambda i, j, k: (i, k)),   # x tile
                pl.BlockSpec((tk, tn), lambda i, j, k: (k, j)),   # W tile
                pl.BlockSpec((1, tn), lambda i, j, k: (0, j)),    # bias tile
            ],
            out_specs=pl.BlockSpec((tm, tn), lambda i, j, k: (i, j)),
        ),
        compiler_params=pltpu.CompilerParams(
            dimension_semantics=("parallel", "parallel", "arbitrary"),
            vmem_limit_bytes=vmem_limit,
        ),
        cost_estimate=cost,
    )(xp, w_t, bias)

    return out_padded[:B, :d_out]


def init_params(key, input_dim, output_dim):
    """Mirror the PyTorch module's init, then do ALL one-time prep here:
       - weight: nn.init.orthogonal_, shape (output_dim, input_dim)
       - bias:   nn.Linear default uniform(-1/sqrt(in), 1/sqrt(in))
       - transpose to (input_dim, output_dim), zero-pad to (Kp, Np) multiples
         of 128, cast weight to bf16 (MXU-native); pad bias to (1, Np) f32.
    """
    k_w, k_b = jax.random.split(key)
    a = jax.random.normal(k_w, (output_dim, input_dim), dtype=jnp.float32)
    if output_dim >= input_dim:
        q, r = jnp.linalg.qr(a)                  # q: (output_dim, input_dim)
        d = jnp.sign(jnp.diagonal(r))
        d = jnp.where(d == 0, 1.0, d)
        weight = q * d[None, :]
    else:
        q, r = jnp.linalg.qr(a.T)                # q: (input_dim, output_dim)
        d = jnp.sign(jnp.diagonal(r))
        d = jnp.where(d == 0, 1.0, d)
        weight = (q * d[None, :]).T
    bound = 1.0 / jnp.sqrt(jnp.float32(input_dim))
    bias = jax.random.uniform(
        k_b, (output_dim,), minval=-bound, maxval=bound, dtype=jnp.float32
    )

    kp = _round_up(input_dim, 128)
    np_ = _round_up(output_dim, 128)
    w_t = weight.T                                               # (D_in, D_out)
    w_t_pad = jnp.pad(w_t, ((0, kp - input_dim), (0, np_ - output_dim)))
    w_t_pad = w_t_pad.astype(jnp.bfloat16)                       # one-time cast
    bias_pad = jnp.pad(bias, (0, np_ - output_dim)).reshape(1, np_)

    return {"w_t": w_t_pad, "bias": bias_pad, "d_in": input_dim, "d_out": output_dim}


if __name__ == "__main__":
    key = jax.random.PRNGKey(0)
    k_x, k_p = jax.random.split(key)

    # Small demo shapes consistent with the module (Linear input/output dims).
    batch, input_dim, output_dim = 8, 32, 64
    x = jax.random.normal(k_x, (batch, input_dim), dtype=jnp.float32)
    params = init_params(k_p, input_dim, output_dim)

    out = quantum_pattern_layer(x, params)
    out = jax.block_until_ready(out)

    # Reference with the same bf16-rounded operands (f32 accumulate), so the
    # comparison isolates kernel correctness; vs the pure-f32 module the
    # difference is just bf16 weight/activation rounding (~1e-2 rel).
    x_bf = x.astype(jnp.bfloat16).astype(jnp.float32)
    w_bf = params["w_t"][:input_dim, :output_dim].astype(jnp.float32)
    b_f = params["bias"][0, :output_dim]
    ref = jnp.maximum(x_bf @ w_bf + b_f, 0.0)

    assert out.shape == (batch, output_dim)
    assert jnp.allclose(out, ref, atol=1e-3, rtol=1e-3)

    print("KERNEL_OK")
</pallas_src>

<mosaic_0001>
module attributes {stable_mosaic.version = 11 : i64} {
  func.func @_linear_relu_kernel(%arg0: i32, %arg1: i32, %arg2: i32, %arg3: memref<8x128xbf16, #tpu.memory_space<vmem>>, %arg4: memref<128x128xbf16, #tpu.memory_space<vmem>>, %arg5: memref<1x128xf32, #tpu.memory_space<vmem>>, %arg6: memref<8x128xf32, #tpu.memory_space<vmem>>) attributes {dimension_semantics = [#tpu.dimension_semantics<parallel>, #tpu.dimension_semantics<parallel>, #tpu.dimension_semantics<arbitrary>], iteration_bounds = array<i64: 1, 1, 1>, scalar_prefetch = 0 : i64, scratch_operands = 0 : i64, tpu.core_type = #tpu.core_type<tc>, window_params = [{transform_indices = @transform_0, window_bounds = array<i64: 8, 128>}, {transform_indices = @transform_1, window_bounds = array<i64: 128, 128>}, {transform_indices = @transform_2, window_bounds = array<i64: 1, 128>}, {transform_indices = @transform_3, window_bounds = array<i64: 8, 128>}]} {
    %c0_i32 = arith.constant 0 : i32
    %0 = arith.cmpi eq, %arg2, %c0_i32 : i32
    %1 = arith.extui %0 : i1 to i32
    %c0_i32_0 = arith.constant 0 : i32
    %2 = arith.cmpi ne, %1, %c0_i32_0 : i32
    scf.if %2 {
      %c0_10 = arith.constant 0 : index
      %c0_11 = arith.constant 0 : index
      %12 = vector.load %arg5[%c0_10, %c0_11] : memref<1x128xf32, #tpu.memory_space<vmem>>, vector<1x128xf32>
      %13 = vector.shape_cast %12 : vector<1x128xf32> to vector<1x128xf32>
      %14 = vector.broadcast %13 : vector<1x128xf32> to vector<8x128xf32>
      %c0_12 = arith.constant 0 : index
      %c0_13 = arith.constant 0 : index
      %15 = vector.load %arg6[%c0_12, %c0_13] : memref<8x128xf32, #tpu.memory_space<vmem>>, vector<8x128xf32>
      tpu.vector_store %arg6[%c0_12, %c0_13], %14 {strides = array<i32>} : memref<8x128xf32, #tpu.memory_space<vmem>>, vector<8x128xf32>,
    } else {
    }
    %c0 = arith.constant 0 : index
    %c0_1 = arith.constant 0 : index
    %3 = vector.load %arg6[%c0, %c0_1] : memref<8x128xf32, #tpu.memory_space<vmem>>, vector<8x128xf32>
    %c0_2 = arith.constant 0 : index
    %c0_3 = arith.constant 0 : index
    %4 = vector.load %arg3[%c0_2, %c0_3] : memref<8x128xbf16, #tpu.memory_space<vmem>>, vector<8x128xbf16>
    %c0_4 = arith.constant 0 : index
    %c0_5 = arith.constant 0 : index
    %5 = vector.load %arg4[%c0_4, %c0_5] : memref<128x128xbf16, #tpu.memory_space<vmem>>, vector<128x128xbf16>
    %cst = arith.constant dense<0.000000e+00> : vector<8x128xf32>
    %6 = tpu.matmul %4, %5, %cst {dimension_numbers = #tpu.dot_dimension_numbers<[1], [0], [0], [1], [0, 0, 1, 1], [], []>} : vector<8x128xbf16>, vector<128x128xbf16>, vector<8x128xf32> -> vector<8x128xf32>
    %7 = arith.addf %3, %6 : vector<8x128xf32>
    %c0_6 = arith.constant 0 : index
    %c0_7 = arith.constant 0 : index
    %8 = vector.load %arg6[%c0_6, %c0_7] : memref<8x128xf32, #tpu.memory_space<vmem>>, vector<8x128xf32>
    tpu.vector_store %arg6[%c0_6, %c0_7], %7 {strides = array<i32>} : memref<8x128xf32, #tpu.memory_space<vmem>>, vector<8x128xf32>,
    %c0_i32_8 = arith.constant 0 : i32
    %9 = arith.cmpi eq, %arg2, %c0_i32_8 : i32
    %10 = arith.extui %9 : i1 to i32
    %c0_i32_9 = arith.constant 0 : i32
    %11 = arith.cmpi ne, %10, %c0_i32_9 : i32
    scf.if %11 {
      %c0_10 = arith.constant 0 : index
      %c0_11 = arith.constant 0 : index
      %12 = vector.load %arg6[%c0_10, %c0_11] : memref<8x128xf32, #tpu.memory_space<vmem>>, vector<8x128xf32>
      %cst_12 = arith.constant 0.000000e+00 : f32
      %13 = vector.broadcast %cst_12 : f32 to vector<8x128xf32>
      %14 = arith.maximumf %12, %13 : vector<8x128xf32>
      %c0_13 = arith.constant 0 : index
      %c0_14 = arith.constant 0 : index
      %15 = vector.load %arg6[%c0_13, %c0_14] : memref<8x128xf32, #tpu.memory_space<vmem>>, vector<8x128xf32>
      tpu.vector_store %arg6[%c0_13, %c0_14], %14 {strides = array<i32>} : memref<8x128xf32, #tpu.memory_space<vmem>>, vector<8x128xf32>,
    } else {
    }
    return
  }
  func.func @transform_0(%arg0: i32, %arg1: i32, %arg2: i32) -> (i32, i32) {
    %c0_i32 = arith.constant 0 : i32
    return %arg0, %arg2 : i32, i32
  }
  func.func @transform_1(%arg0: i32, %arg1: i32, %arg2: i32) -> (i32, i32) {
    %c0_i32 = arith.constant 0 : i32
    return %arg2, %arg1 : i32, i32
  }
  func.func @transform_2(%arg0: i32, %arg1: i32, %arg2: i32) -> (i32, i32) {
    %c0_i32 = arith.constant 0 : i32
    %c0_i32_0 = arith.constant 0 : i32
    return %c0_i32, %arg1 : i32, i32
  }
  func.func @transform_3(%arg0: i32, %arg1: i32, %arg2: i32) -> (i32, i32) {
    %c0_i32 = arith.constant 0 : i32
    return %arg0, %arg1 : i32, i32
  }
}

</mosaic_0001>

<llo_original>
// kernel: tpu_custom_call.1
$region0: #{tpu_custom_call.1}
  #allocation0 [shape = 'u32[]', space=smem, size = 0x4, offset = 0x4, fixed_abs, tag = 'smem constant byte address 0x4 - core index']
  #allocation1 [shape = 'u32[72,128]{1,0:T(1,128)}', space=vmem, size = 0x9000, scoped, tag = 'internal scratch']
  %s0 = inlined_call_operand.hbm [shape: bf16[8,128], index: 0, kind: input, shape index: {}]
  %s1 = inlined_call_operand.hbm [shape: bf16[128,128], index: 1, kind: input, shape index: {}]
  %s2 = inlined_call_operand.vmem [shape: f32[1,128], index: 2, kind: input, shape index: {}]
  %s3 = inlined_call_operand.hbm [shape: f32[8,128], index: 3, kind: output, shape index: {}]
  %s4 = sld [smem:[#allocation0]]
  $region38: #{tpu_custom_call.1} parent=0
    _
  %s6 = ssub.s32 1, %s4
  %s7 = scalar_select 0, %s6, %s4
  $region1: #{tpu_custom_call.1} parent=0
    #allocation2 [shape = 'u8[2048]{0}', space=vmem, size = 0x800, scoped, tag = 'input window, operand 0, single buffered']
    #allocation3 [shape = 's32[1]{0}', space=sflag, size = 0x4, scoped, tag = 'scoped memory for tpu_custom_call.1']
    #allocation4 [shape = 's32[1]{0}', space=sflag, size = 0x4, scoped, tag = 'scoped memory for tpu_custom_call.1']
    #allocation5 [shape = 'u8[32768]{0}', space=vmem, size = 0x8000, scoped, tag = 'input window, operand 1, single buffered']
    #allocation6 [shape = 's32[1]{0}', space=sflag, size = 0x4, scoped, tag = 'scoped memory for tpu_custom_call.1']
    #allocation7 [shape = 'u8[4096]{0}', space=vmem, size = 0x1000, scoped, tag = 'output window, operand 0, single buffered']
    %8 = vsyncpa [#allocation3], 0
    %9 = vsyncpa [#allocation6], 0
    %10 = vsyncpa [#allocation4], 0
    // Predicated region
    $region2: #{tpu_custom_call.1} parent=1 // pred_check
      _
    $region3: #{tpu_custom_call.1} parent=1 // pred_check_branch
      %12 = sbr.rel (0) target = $region5
    $region4: #{tpu_custom_call.1} parent=1 // pred_region
      %14 = vsyncadd [#allocation3], 0
      %s16 = sshll.u32 %s0, 4
      %s17 = int_to_ptr.hbm [resolvable:$true] %s16
      %s18 = sshll.u32 [#allocation2], 4
      %s19 = int_to_ptr.vmem [resolvable:$true] %s18
      %21 = dma.hbm_to_vmem [thread:$0]  %s17, 64, %s19, [#allocation3]
    $region5: #{tpu_custom_call.1} parent=1 // pred_fallthru
      _
    // Predicated region
    $region6: #{tpu_custom_call.1} parent=1 // pred_check
      _
    $region7: #{tpu_custom_call.1} parent=1 // pred_check_branch
      %23 = sbr.rel (0) target = $region9
    $region8: #{tpu_custom_call.1} parent=1 // pred_region
      %25 = vsyncadd [#allocation6], 0
      %s26 = sshll.u32 %s1, 4
      %s27 = int_to_ptr.hbm [resolvable:$true] %s26
      %s28 = sshll.u32 [#allocation5], 4
      %s29 = int_to_ptr.vmem [resolvable:$true] %s28
      %34 = dma.hbm_to_vmem [thread:$0]  %s27, 1024, %s29, [#allocation6], 64, 64, 4
    $region9: #{tpu_custom_call.1} parent=1 // pred_fallthru
      _
    // Predicated region
    $region10: #{tpu_custom_call.1} parent=1 // pred_check
      _
    $region11: #{tpu_custom_call.1} parent=1 // pred_check_branch
      %36 = sbr.rel (0) target = $region13
    $region12: #{tpu_custom_call.1} parent=1 // pred_region
      _
    $region13: #{tpu_custom_call.1} parent=1 // pred_fallthru
      _
    // Predicated region
    $region14: #{tpu_custom_call.1} parent=1 // pred_check
      _
    $region15: #{tpu_custom_call.1} parent=1 // pred_check_branch
      %38 = sbr.rel (0) target = $region17
    $region16: #{tpu_custom_call.1} parent=1 // pred_region
      %40 = dma.done [#allocation3], 64
    $region17: #{tpu_custom_call.1} parent=1 // pred_fallthru
      _
    // Predicated region
    $region18: #{tpu_custom_call.1} parent=1 // pred_check
      _
    $region19: #{tpu_custom_call.1} parent=1 // pred_check_branch
      %42 = sbr.rel (0) target = $region21
    $region20: #{tpu_custom_call.1} parent=1 // pred_region
      %44 = dma.done [#allocation6], 1024
    $region21: #{tpu_custom_call.1} parent=1 // pred_fallthru
      _
    %p45 = scmp.eq.s32.totalorder 0, 0
    // Predicated region
    $region22: #{tpu_custom_call.1} parent=1 // pred_check
      %p46 = pneg %p45
    $region23: #{tpu_custom_call.1} parent=1 // pred_check_branch
      %48 = sbr.rel (%p46) target = $region25
    $region24: #{tpu_custom_call.1} parent=1 // pred_region
      %v49 = vld [vmem:[%s2] sm:$0x1]
      %v51 = vperm.slane %v49, 0
      %53 = vst [vmem:[#allocation7] sm:$0xff] %v51
    $region25: #{tpu_custom_call.1} parent=1 // pred_fallthru
      _
    %v54 = vld [vmem:[#allocation7] sm:$0xff]
    %v55 = vld [vmem:[#allocation2] sm:$0xf]
    %v56 = vld [vmem:[#allocation5] sm:$0xf]
    %v57 = vld [vmem:[#allocation5 + $0x4] sm:$0xf]
    %v58 = vld [vmem:[#allocation5 + $0x8] sm:$0xf]
    %v59 = vld [vmem:[#allocation5 + $0xc] sm:$0xf]
    %v60 = vld [vmem:[#allocation5 + $0x10] sm:$0xf]
    %v61 = vld [vmem:[#allocation5 + $0x14] sm:$0xf]
    %v62 = vld [vmem:[#allocation5 + $0x18] sm:$0xf]
    %v63 = vld [vmem:[#allocation5 + $0x1c] sm:$0xf]
    %v64 = vld [vmem:[#allocation5 + $0x20] sm:$0xf]
    %v65 = vld [vmem:[#allocation5 + $0x24] sm:$0xf]
    %v66 = vld [vmem:[#allocation5 + $0x28] sm:$0xf]
    %v67 = vld [vmem:[#allocation5 + $0x2c] sm:$0xf]
    %v68 = vld [vmem:[#allocation5 + $0x30] sm:$0xf]
    %v69 = vld [vmem:[#allocation5 + $0x34] sm:$0xf]
    %v70 = vld [vmem:[#allocation5 + $0x38] sm:$0xf]
    %v71 = vld [vmem:[#allocation5 + $0x3c] sm:$0xf]
    %v88 = vunpack.c.l.b16 %v56
    %v89 = vunpack.c.l.b16 %v57
    %v90 = vunpack.c.l.b16 %v58
    %v91 = vunpack.c.l.b16 %v59
    %v92 = vunpack.c.l.b16 %v60
    %v93 = vunpack.c.l.b16 %v61
    %v94 = vunpack.c.l.b16 %v62
    %v95 = vunpack.c.l.b16 %v63
    %v96 = vunpack.c.l.b16 %v64
    %v97 = vunpack.c.l.b16 %v65
    %v98 = vunpack.c.l.b16 %v66
    %v99 = vunpack.c.l.b16 %v67
    %v100 = vunpack.c.l.b16 %v68
    %v101 = vunpack.c.l.b16 %v69
    %v102 = vunpack.c.l.b16 %v70
    %v103 = vunpack.c.l.b16 %v71
    %v104 = vpack.c.b16 %v89, %v88
    %v105 = vpack.c.b16 %v91, %v90
    %v106 = vpack.c.b16 %v93, %v92
    %v107 = vpack.c.b16 %v95, %v94
    %v108 = vpack.c.b16 %v97, %v96
    %v109 = vpack.c.b16 %v99, %v98
    %v110 = vpack.c.b16 %v101, %v100
    %v111 = vpack.c.b16 %v103, %v102
    %120 = vmatpush.bf16.msra.mxu0 %v111
    %121 = vmatpush.bf16.msra.mxu0 %v110
    %122 = vmatpush.bf16.msra.mxu0 %v109
    %123 = vmatpush.bf16.msra.mxu0 %v108
    %124 = vmatpush.bf16.msra.mxu0 %v107
    %125 = vmatpush.bf16.msra.mxu0 %v106
    %126 = vmatpush.bf16.msra.mxu0 %v105
    %127 = vmatpush.bf16.msra.mxu0 %v104
    %128 = vmatmul.bf16.gmra.mxu0 %v55
    %v129 = vpop.f32.mrf.mxu0
    %v130 = vadd.f32 0.0, %v129
    %v131 = vpop.f32.mrf.mxu0
    %132 = vdwg.mxu0
    %v133 = vadd.f32 %v54, %v130
    %134 = vst [vmem:[#allocation7] sm:$0xff] %v133
    // Predicated region
    $region26: #{tpu_custom_call.1} parent=1 // pred_check
      %p135 = pneg %p45
    $region27: #{tpu_custom_call.1} parent=1 // pred_check_branch
      %137 = sbr.rel (%p135) target = $region29
    $region28: #{tpu_custom_call.1} parent=1 // pred_region
      %v138 = vld [vmem:[#allocation7] sm:$0xff]
      %v139 = vmax.f32 %v138, 0.0
      %140 = vst [vmem:[#allocation7] sm:$0xff] %v139
    $region29: #{tpu_custom_call.1} parent=1 // pred_fallthru
      _
    // Predicated region
    $region30: #{tpu_custom_call.1} parent=1 // pred_check
      _
    $region31: #{tpu_custom_call.1} parent=1 // pred_check_branch
      %142 = sbr.rel (0) target = $region33
    $region32: #{tpu_custom_call.1} parent=1 // pred_region
      %144 = vsyncadd [#allocation4], 0
      %s146 = sshll.u32 [#allocation7], 4
      %s147 = int_to_ptr.vmem [resolvable:$true] %s146
      %s148 = sshll.u32 %s3, 4
      %s149 = int_to_ptr.hbm [resolvable:$true] %s148
      %151 = dma.vmem_to_hbm [thread:$0]  %s147, 128, %s149, [#allocation4]
    $region33: #{tpu_custom_call.1} parent=1 // pred_fallthru
      _
    // Predicated region
    $region34: #{tpu_custom_call.1} parent=1 // pred_check
      _
    $region35: #{tpu_custom_call.1} parent=1 // pred_check_branch
      %153 = sbr.rel (0) target = $region37
    $region36: #{tpu_custom_call.1} parent=1 // pred_region
      %155 = dma.done [#allocation4], 128
    $region37: #{tpu_custom_call.1} parent=1 // pred_fallthru
      _
    %156 = vsyncpa [#allocation3], 1
    %157 = vsyncpa [#allocation6], 1
    %158 = vsyncpa [#allocation4], 1

</llo_original>
